<compile_context>
chip_gen: v7x
topology: tpu7x:2x2x1
jax: 0.10.0
libtpu: 0.0.40
codegen_flags: <defaults>
</compile_context>

<pallas_src>
import functools

import jax
import jax.numpy as jnp
from jax.experimental import pallas as pl
from jax.experimental.pallas import tpu as pltpu

_LN_EPS = 1e-5
_GELU_C = 0.7978845608028654  # sqrt(2/pi)


def _gelu_tanh(x):
    # tanh-approx GELU (maps to the EUP tanh). PyTorch nn.GELU() default is the
    # exact erf form; the two differ by < 1e-3 absolute.
    x = x.astype(jnp.float32)
    return 0.5 * x * (1.0 + jnp.tanh(jnp.float32(_GELU_C) *
                                     (x + jnp.float32(0.044715) * x * x * x)))


def _round_up(n, m):
    return ((n + m - 1) // m) * m


def _fused_proj_kernel(x_ref, w1_ref, b1_ref, w2_ref, b2_ref, g_ref, bt_ref,
                       o_ref, acc_ref, *, eps, p_valid):
    """out = LayerNorm(GELU(x @ w1 + b1) @ w2 + b2) * gamma + beta.

    Grid = (M tiles, K tiles over input_dim); K is the reduction axis (last).
    The (tm, H_pad) hidden tile is accumulated in f32 VMEM scratch; at the last
    K step the second matmul + LayerNorm run entirely on-chip.
    """
    k = pl.program_id(1)

    @pl.when(k == 0)
    def _():
        acc_ref[...] = jnp.zeros_like(acc_ref)

    # bf16 MXU matmul with f32 accumulation.
    acc_ref[...] += jnp.dot(x_ref[...], w1_ref[...],
                            preferred_element_type=jnp.float32)

    @pl.when(k == pl.num_programs(1) - 1)
    def _():
        h = _gelu_tanh(acc_ref[...] + b1_ref[...])              # f32 (tm, H_pad)
        # TODO(synk): nn.Dropout(p=0.1) is identity in eval mode; training-mode
        # stochastic masking (pltpu.prng_seed + stateful_bernoulli) not implemented.
        y = jnp.dot(h.astype(jnp.bfloat16), w2_ref[...],
                    preferred_element_type=jnp.float32) + b2_ref[...]
        # LayerNorm over the TRUE projection width; padded lanes are masked so
        # they do not contaminate the row statistics.
        col = jax.lax.broadcasted_iota(jnp.int32, y.shape, dimension=1)
        mask = col < p_valid
        y = jnp.where(mask, y, 0.0)
        inv_p = jnp.float32(1.0 / p_valid)
        mean = jnp.sum(y, axis=-1, keepdims=True) * inv_p
        cen = jnp.where(mask, y - mean, 0.0)
        var = jnp.sum(cen * cen, axis=-1, keepdims=True) * inv_p
        inv = jax.lax.rsqrt(var + jnp.float32(eps))
        o_ref[...] = (cen * inv * g_ref[...] + bt_ref[...]).astype(o_ref.dtype)


def enhanced_projection(x, w1, b1, w2, b2, gamma, beta, *, eps=_LN_EPS,
                        block_m=256, block_k=512):
    """JAX/Pallas equivalent of EnhancedProjection.forward (eval mode).

    x: [..., input_dim]
    w1: [input_dim, hidden_dim], b1: [hidden_dim]
    w2: [hidden_dim, projection_dim], b2/gamma/beta: [projection_dim]
    """
    orig_shape = x.shape
    d_in = orig_shape[-1]
    x2 = x.reshape(-1, d_in)
    M = x2.shape[0]
    H = w1.shape[1]
    P = w2.shape[1]

    # Tile picks: lane-aligned tiles for large dims, padded (never full-extent
    # fallback) for awkward ones. hidden/projection widths stay fully resident
    # (module default is hidden = 2 * projection, so they are modest).
    tm = min(block_m, _round_up(M, 8))
    tk = min(block_k, _round_up(d_in, 128))
    m_pad = _round_up(M, tm)
    k_pad = _round_up(d_in, tk)
    h_pad = _round_up(H, 128)
    p_pad = _round_up(P, 128)
    # TODO(synk): for very large hidden/projection dims where w2 (h_pad x p_pad)
    # no longer fits VMEM, fall back to a two-call tiled-N variant.

    f32, bf16 = jnp.float32, jnp.bfloat16
    x_p = jnp.zeros((m_pad, k_pad), bf16).at[:M, :d_in].set(x2.astype(bf16))
    w1_p = jnp.zeros((k_pad, h_pad), bf16).at[:d_in, :H].set(w1.astype(bf16))
    b1_p = jnp.zeros((1, h_pad), f32).at[0, :H].set(b1.astype(f32))
    w2_p = jnp.zeros((h_pad, p_pad), bf16).at[:H, :P].set(w2.astype(bf16))
    b2_p = jnp.zeros((1, p_pad), f32).at[0, :P].set(b2.astype(f32))
    g_p = jnp.zeros((1, p_pad), f32).at[0, :P].set(gamma.astype(f32))
    bt_p = jnp.zeros((1, p_pad), f32).at[0, :P].set(beta.astype(f32))

    grid = (m_pad // tm, k_pad // tk)

    # Conservative working-set estimate (double-buffered blocks + scratch) so
    # the scoped-VMEM limit is explicit on every chip generation.
    est = (2 * tm * tk * 2          # x block (bf16)
           + 2 * tk * h_pad * 2     # w1 block (bf16)
           + 2 * h_pad * p_pad * 2  # w2 (bf16, resident)
           + 2 * tm * p_pad * 4     # output block (f32)
           + tm * h_pad * 4         # f32 accumulator scratch
           + 4 * p_pad * 4 + h_pad * 4)
    vmem_limit = int(min(max(2 * est, 32 << 20), 64 << 20))

    out = pl.pallas_call(
        functools.partial(_fused_proj_kernel, eps=eps, p_valid=P),
        out_shape=jax.ShapeDtypeStruct((m_pad, p_pad), jnp.float32),
        grid_spec=pltpu.PrefetchScalarGridSpec(
            num_scalar_prefetch=0,
            grid=grid,
            in_specs=[
                pl.BlockSpec((tm, tk), lambda i, k: (i, k)),        # x
                pl.BlockSpec((tk, h_pad), lambda i, k: (k, 0)),     # w1
                pl.BlockSpec((1, h_pad), lambda i, k: (0, 0)),      # b1
                pl.BlockSpec((h_pad, p_pad), lambda i, k: (0, 0)),  # w2
                pl.BlockSpec((1, p_pad), lambda i, k: (0, 0)),      # b2
                pl.BlockSpec((1, p_pad), lambda i, k: (0, 0)),      # gamma
                pl.BlockSpec((1, p_pad), lambda i, k: (0, 0)),      # beta
            ],
            out_specs=pl.BlockSpec((tm, p_pad), lambda i, k: (i, 0)),
            scratch_shapes=[pltpu.VMEM((tm, h_pad), jnp.float32)],
        ),
        compiler_params=pltpu.CompilerParams(
            dimension_semantics=("parallel", "arbitrary"),
            vmem_limit_bytes=vmem_limit),
    )(x_p, w1_p, b1_p, w2_p, b2_p, g_p, bt_p)

    return out[:M, :P].reshape(*orig_shape[:-1], P)


def _reference(x, w1, b1, w2, b2, gamma, beta, eps=_LN_EPS):
    # Pure-JAX f32 reference mirroring the PyTorch forward (eval mode, tanh GELU).
    x = x.astype(jnp.float32)
    h = _gelu_tanh(x @ w1 + b1)
    y = h @ w2 + b2
    mean = y.mean(axis=-1, keepdims=True)
    var = ((y - mean) ** 2).mean(axis=-1, keepdims=True)
    return (y - mean) * jax.lax.rsqrt(var + eps) * gamma + beta


if __name__ == "__main__":
    key = jax.random.PRNGKey(0)
    ks = jax.random.split(key, 7)

    batch, seq, input_dim, projection_dim = 2, 8, 32, 16
    hidden_dim = projection_dim * 2  # module default

    x = jax.random.normal(ks[0], (batch, seq, input_dim), jnp.float32)
    w1 = jax.random.normal(ks[1], (input_dim, hidden_dim), jnp.float32) * 0.1
    b1 = jax.random.normal(ks[2], (hidden_dim,), jnp.float32) * 0.1
    w2 = jax.random.normal(ks[3], (hidden_dim, projection_dim), jnp.float32) * 0.1
    b2 = jax.random.normal(ks[4], (projection_dim,), jnp.float32) * 0.1
    gamma = 1.0 + 0.1 * jax.random.normal(ks[5], (projection_dim,), jnp.float32)
    beta = 0.1 * jax.random.normal(ks[6], (projection_dim,), jnp.float32)

    out = enhanced_projection(x, w1, b1, w2, b2, gamma, beta)
    jax.block_until_ready(out)

    ref = _reference(x, w1, b1, w2, b2, gamma, beta)
    assert out.shape == (batch, seq, projection_dim), out.shape
    # bf16 MXU operands (f32 accumulation / statistics) -> loosened tolerance.
    assert jnp.allclose(out, ref, atol=5e-2, rtol=5e-2), (
        float(jnp.max(jnp.abs(out - ref))))

    print("KERNEL_OK")
</pallas_src>

<mosaic_0001>
module attributes {stable_mosaic.version = 11 : i64} {
  func.func @_fused_proj_kernel(%arg0: i32, %arg1: i32, %arg2: memref<16x128xbf16, #tpu.memory_space<vmem>>, %arg3: memref<128x128xbf16, #tpu.memory_space<vmem>>, %arg4: memref<1x128xf32, #tpu.memory_space<vmem>>, %arg5: memref<128x128xbf16, #tpu.memory_space<vmem>>, %arg6: memref<1x128xf32, #tpu.memory_space<vmem>>, %arg7: memref<1x128xf32, #tpu.memory_space<vmem>>, %arg8: memref<1x128xf32, #tpu.memory_space<vmem>>, %arg9: memref<16x128xf32, #tpu.memory_space<vmem>>, %arg10: memref<16x128xf32, #tpu.memory_space<vmem>>) attributes {dimension_semantics = [#tpu.dimension_semantics<parallel>, #tpu.dimension_semantics<arbitrary>], iteration_bounds = array<i64: 1, 1>, scalar_prefetch = 0 : i64, scratch_operands = 1 : i64, tpu.core_type = #tpu.core_type<tc>, window_params = [{transform_indices = @transform_0, window_bounds = array<i64: 16, 128>}, {transform_indices = @transform_1, window_bounds = array<i64: 128, 128>}, {pipeline_mode = #tpu.pipeline_mode<synchronous>, transform_indices = @transform_2, window_bounds = array<i64: 1, 128>}, {pipeline_mode = #tpu.pipeline_mode<synchronous>, transform_indices = @transform_3, window_bounds = array<i64: 128, 128>}, {pipeline_mode = #tpu.pipeline_mode<synchronous>, transform_indices = @transform_4, window_bounds = array<i64: 1, 128>}, {pipeline_mode = #tpu.pipeline_mode<synchronous>, transform_indices = @transform_5, window_bounds = array<i64: 1, 128>}, {pipeline_mode = #tpu.pipeline_mode<synchronous>, transform_indices = @transform_6, window_bounds = array<i64: 1, 128>}, {transform_indices = @transform_7, window_bounds = array<i64: 16, 128>}]} {
    %c0_i32 = arith.constant 0 : i32
    %0 = arith.cmpi eq, %arg1, %c0_i32 : i32
    %1 = arith.extui %0 : i1 to i32
    %c0_i32_0 = arith.constant 0 : i32
    %2 = arith.cmpi ne, %1, %c0_i32_0 : i32
    scf.if %2 {
      %cst_10 = arith.constant 0.000000e+00 : f32
      %12 = vector.broadcast %cst_10 : f32 to vector<16x128xf32>
      %c0_11 = arith.constant 0 : index
      %c0_12 = arith.constant 0 : index
      %13 = vector.load %arg10[%c0_11, %c0_12] : memref<16x128xf32, #tpu.memory_space<vmem>>, vector<16x128xf32>
      tpu.vector_store %arg10[%c0_11, %c0_12], %12 {strides = array<i32>} : memref<16x128xf32, #tpu.memory_space<vmem>>, vector<16x128xf32>,
    } else {
    }
    %c0 = arith.constant 0 : index
    %c0_1 = arith.constant 0 : index
    %3 = vector.load %arg10[%c0, %c0_1] : memref<16x128xf32, #tpu.memory_space<vmem>>, vector<16x128xf32>
    %c0_2 = arith.constant 0 : index
    %c0_3 = arith.constant 0 : index
    %4 = vector.load %arg2[%c0_2, %c0_3] : memref<16x128xbf16, #tpu.memory_space<vmem>>, vector<16x128xbf16>
    %c0_4 = arith.constant 0 : index
    %c0_5 = arith.constant 0 : index
    %5 = vector.load %arg3[%c0_4, %c0_5] : memref<128x128xbf16, #tpu.memory_space<vmem>>, vector<128x128xbf16>
    %cst = arith.constant dense<0.000000e+00> : vector<16x128xf32>
    %6 = tpu.matmul %4, %5, %cst {dimension_numbers = #tpu.dot_dimension_numbers<[1], [0], [0], [1], [0, 0, 1, 1], [], []>} : vector<16x128xbf16>, vector<128x128xbf16>, vector<16x128xf32> -> vector<16x128xf32>
    %7 = arith.addf %3, %6 : vector<16x128xf32>
    %c0_6 = arith.constant 0 : index
    %c0_7 = arith.constant 0 : index
    %8 = vector.load %arg10[%c0_6, %c0_7] : memref<16x128xf32, #tpu.memory_space<vmem>>, vector<16x128xf32>
    tpu.vector_store %arg10[%c0_6, %c0_7], %7 {strides = array<i32>} : memref<16x128xf32, #tpu.memory_space<vmem>>, vector<16x128xf32>,
    %c0_i32_8 = arith.constant 0 : i32
    %9 = arith.cmpi eq, %arg1, %c0_i32_8 : i32
    %10 = arith.extui %9 : i1 to i32
    %c0_i32_9 = arith.constant 0 : i32
    %11 = arith.cmpi ne, %10, %c0_i32_9 : i32
    scf.if %11 {
      %c0_10 = arith.constant 0 : index
      %c0_11 = arith.constant 0 : index
      %12 = vector.load %arg10[%c0_10, %c0_11] : memref<16x128xf32, #tpu.memory_space<vmem>>, vector<16x128xf32>
      %c0_12 = arith.constant 0 : index
      %c0_13 = arith.constant 0 : index
      %13 = vector.load %arg4[%c0_12, %c0_13] : memref<1x128xf32, #tpu.memory_space<vmem>>, vector<1x128xf32>
      %14 = vector.broadcast %13 : vector<1x128xf32> to vector<16x128xf32>
      %15 = arith.addf %12, %14 : vector<16x128xf32>
      %cst_14 = arith.constant 5.000000e-01 : f32
      %16 = vector.broadcast %cst_14 : f32 to vector<16x128xf32>
      %17 = arith.mulf %16, %15 : vector<16x128xf32>
      %cst_15 = arith.constant 4.471500e-02 : f32
      %18 = vector.broadcast %cst_15 : f32 to vector<16x128xf32>
      %19 = arith.mulf %18, %15 : vector<16x128xf32>
      %20 = arith.mulf %19, %15 : vector<16x128xf32>
      %21 = arith.mulf %20, %15 : vector<16x128xf32>
      %22 = arith.addf %15, %21 : vector<16x128xf32>
      %cst_16 = arith.constant 0.797884583 : f32
      %23 = vector.broadcast %cst_16 : f32 to vector<16x128xf32>
      %24 = arith.mulf %23, %22 : vector<16x128xf32>
      %25 = math.tanh %24 : vector<16x128xf32>
      %cst_17 = arith.constant 1.000000e+00 : f32
      %26 = vector.broadcast %cst_17 : f32 to vector<16x128xf32>
      %27 = arith.addf %26, %25 : vector<16x128xf32>
      %28 = arith.mulf %17, %27 : vector<16x128xf32>
      %29 = arith.truncf %28 : vector<16x128xf32> to vector<16x128xbf16>
      %c0_18 = arith.constant 0 : index
      %c0_19 = arith.constant 0 : index
      %30 = vector.load %arg5[%c0_18, %c0_19] : memref<128x128xbf16, #tpu.memory_space<vmem>>, vector<128x128xbf16>
      %cst_20 = arith.constant dense<0.000000e+00> : vector<16x128xf32>
      %31 = tpu.matmul %29, %30, %cst_20 {dimension_numbers = #tpu.dot_dimension_numbers<[1], [0], [0], [1], [0, 0, 1, 1], [], []>} : vector<16x128xbf16>, vector<128x128xbf16>, vector<16x128xf32> -> vector<16x128xf32>
      %c0_21 = arith.constant 0 : index
      %c0_22 = arith.constant 0 : index
      %32 = vector.load %arg6[%c0_21, %c0_22] : memref<1x128xf32, #tpu.memory_space<vmem>>, vector<1x128xf32>
      %33 = vector.broadcast %32 : vector<1x128xf32> to vector<16x128xf32>
      %34 = arith.addf %31, %33 : vector<16x128xf32>
      %35 = tpu.iota {dimensions = array<i32: 1>} : vector<16x128xi32>
      %c16_i32 = arith.constant 16 : i32
      %36 = vector.broadcast %c16_i32 : i32 to vector<16x128xi32>
      %37 = arith.cmpi slt, %35, %36 : vector<16x128xi32>
      %cst_23 = arith.constant 0.000000e+00 : f32
      %38 = vector.broadcast %cst_23 : f32 to vector<16x128xf32>
      %39 = arith.select %37, %34, %38 : vector<16x128xi1>, vector<16x128xf32>
      %cst_24 = arith.constant dense<0.000000e+00> : vector<16xf32>
      %40 = vector.multi_reduction <add>, %39, %cst_24 [1] : vector<16x128xf32> to vector<16xf32>
      %41 = vector.shape_cast %40 : vector<16xf32> to vector<16x1xf32>
      %cst_25 = arith.constant 6.250000e-02 : f32
      %42 = vector.broadcast %cst_25 : f32 to vector<16x1xf32>
      %43 = arith.mulf %41, %42 : vector<16x1xf32>
      %44 = vector.broadcast %43 : vector<16x1xf32> to vector<16x128xf32>
      %45 = arith.subf %39, %44 : vector<16x128xf32>
      %cst_26 = arith.constant 0.000000e+00 : f32
      %46 = vector.broadcast %cst_26 : f32 to vector<16x128xf32>
      %47 = arith.select %37, %45, %46 : vector<16x128xi1>, vector<16x128xf32>
      %48 = arith.mulf %47, %47 : vector<16x128xf32>
      %cst_27 = arith.constant dense<0.000000e+00> : vector<16xf32>
      %49 = vector.multi_reduction <add>, %48, %cst_27 [1] : vector<16x128xf32> to vector<16xf32>
      %50 = vector.shape_cast %49 : vector<16xf32> to vector<16x1xf32>
      %cst_28 = arith.constant 6.250000e-02 : f32
      %51 = vector.broadcast %cst_28 : f32 to vector<16x1xf32>
      %52 = arith.mulf %50, %51 : vector<16x1xf32>
      %cst_29 = arith.constant 9.99999974E-6 : f32
      %53 = vector.broadcast %cst_29 : f32 to vector<16x1xf32>
      %54 = arith.addf %52, %53 : vector<16x1xf32>
      %55 = math.rsqrt %54 : vector<16x1xf32>
      %56 = vector.broadcast %55 : vector<16x1xf32> to vector<16x128xf32>
      %57 = arith.mulf %47, %56 : vector<16x128xf32>
      %c0_30 = arith.constant 0 : index
      %c0_31 = arith.constant 0 : index
      %58 = vector.load %arg7[%c0_30, %c0_31] : memref<1x128xf32, #tpu.memory_space<vmem>>, vector<1x128xf32>
      %59 = vector.broadcast %58 : vector<1x128xf32> to vector<16x128xf32>
      %60 = arith.mulf %57, %59 : vector<16x128xf32>
      %c0_32 = arith.constant 0 : index
      %c0_33 = arith.constant 0 : index
      %61 = vector.load %arg8[%c0_32, %c0_33] : memref<1x128xf32, #tpu.memory_space<vmem>>, vector<1x128xf32>
      %62 = vector.broadcast %61 : vector<1x128xf32> to vector<16x128xf32>
      %63 = arith.addf %60, %62 : vector<16x128xf32>
      %c0_34 = arith.constant 0 : index
      %c0_35 = arith.constant 0 : index
      %64 = vector.load %arg9[%c0_34, %c0_35] : memref<16x128xf32, #tpu.memory_space<vmem>>, vector<16x128xf32>
      tpu.vector_store %arg9[%c0_34, %c0_35], %63 {strides = array<i32>} : memref<16x128xf32, #tpu.memory_space<vmem>>, vector<16x128xf32>,
    } else {
    }
    return
  }
  func.func @transform_0(%arg0: i32, %arg1: i32) -> (i32, i32) {
    %c0_i32 = arith.constant 0 : i32
    return %arg0, %arg1 : i32, i32
  }
  func.func @transform_1(%arg0: i32, %arg1: i32) -> (i32, i32) {
    %c0_i32 = arith.constant 0 : i32
    %c0_i32_0 = arith.constant 0 : i32
    return %arg1, %c0_i32 : i32, i32
  }
  func.func @transform_2(%arg0: i32, %arg1: i32) -> (i32, i32) {
    %c0_i32 = arith.constant 0 : i32
    %c0_i32_0 = arith.constant 0 : i32
    %c0_i32_1 = arith.constant 0 : i32
    return %c0_i32, %c0_i32_0 : i32, i32
  }
  func.func @transform_3(%arg0: i32, %arg1: i32) -> (i32, i32) {
    %c0_i32 = arith.constant 0 : i32
    %c0_i32_0 = arith.constant 0 : i32
    %c0_i32_1 = arith.constant 0 : i32
    return %c0_i32, %c0_i32_0 : i32, i32
  }
  func.func @transform_4(%arg0: i32, %arg1: i32) -> (i32, i32) {
    %c0_i32 = arith.constant 0 : i32
    %c0_i32_0 = arith.constant 0 : i32
    %c0_i32_1 = arith.constant 0 : i32
    return %c0_i32, %c0_i32_0 : i32, i32
  }
  func.func @transform_5(%arg0: i32, %arg1: i32) -> (i32, i32) {
    %c0_i32 = arith.constant 0 : i32
    %c0_i32_0 = arith.constant 0 : i32
    %c0_i32_1 = arith.constant 0 : i32
    return %c0_i32, %c0_i32_0 : i32, i32
  }
  func.func @transform_6(%arg0: i32, %arg1: i32) -> (i32, i32) {
    %c0_i32 = arith.constant 0 : i32
    %c0_i32_0 = arith.constant 0 : i32
    %c0_i32_1 = arith.constant 0 : i32
    return %c0_i32, %c0_i32_0 : i32, i32
  }
  func.func @transform_7(%arg0: i32, %arg1: i32) -> (i32, i32) {
    %c0_i32 = arith.constant 0 : i32
    %c0_i32_0 = arith.constant 0 : i32
    return %arg0, %c0_i32 : i32, i32
  }
}

</mosaic_0001>

<llo_original>
// kernel: tpu_custom_call.1
$region0: #{tpu_custom_call.1}
  #allocation0 [shape = 'u32[]', space=smem, size = 0x4, offset = 0x4, fixed_abs, tag = 'smem constant byte address 0x4 - core index']
  #allocation1 [shape = 'u32[144,128]{1,0:T(1,128)}', space=vmem, size = 0x12000, scoped, tag = 'internal scratch']
  #allocation2 [shape = 'f32[16,128]{1,0:T(8,128)}', space=vmem, size = 0x2000, scoped, tag = 'scratch operand']
  %s0 = inlined_call_operand.hbm [shape: bf16[16,128], index: 0, kind: input, shape index: {}]
  %s1 = inlined_call_operand.hbm [shape: bf16[128,128], index: 1, kind: input, shape index: {}]
  %s2 = inlined_call_operand.vmem [shape: f32[1,128], index: 2, kind: input, shape index: {}]
  %s3 = inlined_call_operand.hbm [shape: bf16[128,128], index: 3, kind: input, shape index: {}]
  %s4 = inlined_call_operand.vmem [shape: f32[1,128], index: 4, kind: input, shape index: {}]
  %s5 = inlined_call_operand.vmem [shape: f32[1,128], index: 5, kind: input, shape index: {}]
  %s6 = inlined_call_operand.vmem [shape: f32[1,128], index: 6, kind: input, shape index: {}]
  %s7 = inlined_call_operand.hbm [shape: f32[16,128], index: 7, kind: output, shape index: {}]
  %s8 = sld [smem:[#allocation0]]
  $region58: #{tpu_custom_call.1} parent=0
    _
  %s10 = ssub.s32 1, %s8
  %s11 = scalar_select 0, %s10, %s8
  $region1: #{tpu_custom_call.1} parent=0
    #allocation3 [shape = 'u8[4096]{0}', space=vmem, size = 0x1000, scoped, tag = 'input window, operand 0, single buffered']
    #allocation4 [shape = 's32[1]{0}', space=sflag, size = 0x4, scoped, tag = 'scoped memory for tpu_custom_call.1']
    #allocation5 [shape = 's32[1]{0}', space=sflag, size = 0x4, scoped, tag = 'scoped memory for tpu_custom_call.1']
    #allocation6 [shape = 'u8[32768]{0}', space=vmem, size = 0x8000, scoped, tag = 'input window, operand 1, single buffered']
    #allocation7 [shape = 's32[1]{0}', space=sflag, size = 0x4, scoped, tag = 'scoped memory for tpu_custom_call.1']
    #allocation8 [shape = 'u8[32768]{0}', space=vmem, size = 0x8000, scoped, tag = 'input window, operand 3, single buffered']
    #allocation9 [shape = 'u8[8192]{0}', space=vmem, size = 0x2000, scoped, tag = 'output window, operand 0, single buffered']
    %12 = vsyncpa [#allocation4], 0
    %13 = vsyncpa [#allocation7], 0
    %14 = vsyncpa [#allocation5], 0
    // Predicated region
    $region2: #{tpu_custom_call.1} parent=1 // pred_check
      _
    $region3: #{tpu_custom_call.1} parent=1 // pred_check_branch
      %16 = sbr.rel (0) target = $region5
    $region4: #{tpu_custom_call.1} parent=1 // pred_region
      %s18 = ssub.s32 128, 128
      %19 = vsyncadd [#allocation4], %s18
      %s20 = sshll.u32 [#allocation3], 4
      %s21 = int_to_ptr.vmem [resolvable:$true] %s20
      %26 = dma.hbm_to_vmem [thread:$0]  %s0, 128, %s21, [#allocation4], 64, 64, 4
    $region5: #{tpu_custom_call.1} parent=1 // pred_fallthru
      _
    // Predicated region
    $region6: #{tpu_custom_call.1} parent=1 // pred_check
      _
    $region7: #{tpu_custom_call.1} parent=1 // pred_check_branch
      %28 = sbr.rel (0) target = $region9
    $region8: #{tpu_custom_call.1} parent=1 // pred_region
      %s30 = ssub.s32 1024, 1024
      %31 = vsyncadd [#allocation7], %s30
      %s32 = sshll.u32 [#allocation6], 4
      %s33 = int_to_ptr.vmem [resolvable:$true] %s32
      %38 = dma.hbm_to_vmem [thread:$0]  %s1, 1024, %s33, [#allocation7], 64, 64, 4
    $region9: #{tpu_custom_call.1} parent=1 // pred_fallthru
      _
    // Predicated region
    $region10: #{tpu_custom_call.1} parent=1 // pred_check
      _
    $region11: #{tpu_custom_call.1} parent=1 // pred_check_branch
      %40 = sbr.rel (0) target = $region13
    $region12: #{tpu_custom_call.1} parent=1 // pred_region
      _
    $region13: #{tpu_custom_call.1} parent=1 // pred_fallthru
      _
    // Predicated region
    $region14: #{tpu_custom_call.1} parent=1 // pred_check
      _
    $region15: #{tpu_custom_call.1} parent=1 // pred_check_branch
      %42 = sbr.rel (0) target = $region17
    $region16: #{tpu_custom_call.1} parent=1 // pred_region
      %s44 = ssub.s32 1024, 1024
      %45 = vsyncadd [#allocation7], %s44
      %s46 = sshll.u32 [#allocation8], 4
      %s47 = int_to_ptr.vmem [resolvable:$true] %s46
      %52 = dma.hbm_to_vmem [thread:$0]  %s3, 1024, %s47, [#allocation7], 64, 64, 4
    $region17: #{tpu_custom_call.1} parent=1 // pred_fallthru
      _
    // Predicated region
    $region18: #{tpu_custom_call.1} parent=1 // pred_check
      _
    $region19: #{tpu_custom_call.1} parent=1 // pred_check_branch
      %54 = sbr.rel (0) target = $region21
    $region20: #{tpu_custom_call.1} parent=1 // pred_region
      _
    $region21: #{tpu_custom_call.1} parent=1 // pred_fallthru
      _
    // Predicated region
    $region22: #{tpu_custom_call.1} parent=1 // pred_check
      _
    $region23: #{tpu_custom_call.1} parent=1 // pred_check_branch
      %56 = sbr.rel (0) target = $region25
    $region24: #{tpu_custom_call.1} parent=1 // pred_region
      _
    $region25: #{tpu_custom_call.1} parent=1 // pred_fallthru
      _
    // Predicated region
    $region26: #{tpu_custom_call.1} parent=1 // pred_check
      _
    $region27: #{tpu_custom_call.1} parent=1 // pred_check_branch
      %58 = sbr.rel (0) target = $region29
    $region28: #{tpu_custom_call.1} parent=1 // pred_region
      _
    $region29: #{tpu_custom_call.1} parent=1 // pred_fallthru
      _
    // Predicated region
    $region30: #{tpu_custom_call.1} parent=1 // pred_check
      _
    $region31: #{tpu_custom_call.1} parent=1 // pred_check_branch
      %60 = sbr.rel (0) target = $region33
    $region32: #{tpu_custom_call.1} parent=1 // pred_region
      %61 = dma.done [#allocation4], 128
    $region33: #{tpu_custom_call.1} parent=1 // pred_fallthru
      _
    // Predicated region
    $region34: #{tpu_custom_call.1} parent=1 // pred_check
      _
    $region35: #{tpu_custom_call.1} parent=1 // pred_check_branch
      %63 = sbr.rel (0) target = $region37
    $region36: #{tpu_custom_call.1} parent=1 // pred_region
      %64 = dma.done [#allocation7], 1024
    $region37: #{tpu_custom_call.1} parent=1 // pred_fallthru
      _
    // Predicated region
    $region38: #{tpu_custom_call.1} parent=1 // pred_check
      _
    $region39: #{tpu_custom_call.1} parent=1 // pred_check_branch
      %66 = sbr.rel (0) target = $region41
    $region40: #{tpu_custom_call.1} parent=1 // pred_region
      %67 = dma.done [#allocation7], 1024
    $region41: #{tpu_custom_call.1} parent=1 // pred_fallthru
      _
    %p69 = scmp.eq.s32.totalorder 0, 0
    // Predicated region
    $region42: #{tpu_custom_call.1} parent=1 // pred_check
      %p70 = pneg %p69
    $region43: #{tpu_custom_call.1} parent=1 // pred_check_branch
      %72 = sbr.rel (%p70) target = $region45
    $region44: #{tpu_custom_call.1} parent=1 // pred_region
      %73 = vst [vmem:[#allocation2] sm:$0xff] 0.0
      %74 = vst [vmem:[#allocation2 + $0x8] sm:$0xff] 0.0
    $region45: #{tpu_custom_call.1} parent=1 // pred_fallthru
      _
    %v75 = vld [vmem:[#allocation2] sm:$0xff]
    %v76 = vld [vmem:[#allocation2 + $0x8] sm:$0xff]
    %v77 = vld [vmem:[#allocation3] sm:$0xf]
    %v78 = vld [vmem:[#allocation3 + $0x4] sm:$0xf]
    %v79 = vld [vmem:[#allocation6] sm:$0xf]
    %v80 = vld [vmem:[#allocation6 + $0x4] sm:$0xf]
    %v81 = vld [vmem:[#allocation6 + $0x8] sm:$0xf]
    %v82 = vld [vmem:[#allocation6 + $0xc] sm:$0xf]
    %v83 = vld [vmem:[#allocation6 + $0x10] sm:$0xf]
    %v84 = vld [vmem:[#allocation6 + $0x14] sm:$0xf]
    %v85 = vld [vmem:[#allocation6 + $0x18] sm:$0xf]
    %v86 = vld [vmem:[#allocation6 + $0x1c] sm:$0xf]
    %v87 = vld [vmem:[#allocation6 + $0x20] sm:$0xf]
    %v88 = vld [vmem:[#allocation6 + $0x24] sm:$0xf]
    %v89 = vld [vmem:[#allocation6 + $0x28] sm:$0xf]
    %v90 = vld [vmem:[#allocation6 + $0x2c] sm:$0xf]
    %v91 = vld [vmem:[#allocation6 + $0x30] sm:$0xf]
    %v92 = vld [vmem:[#allocation6 + $0x34] sm:$0xf]
    %v93 = vld [vmem:[#allocation6 + $0x38] sm:$0xf]
    %v94 = vld [vmem:[#allocation6 + $0x3c] sm:$0xf]
    %v97 = vunpack.c.l.b16 %v77
    %v98 = vunpack.c.l.b16 %v78
    %v99 = vpack.c.b16 %v98, %v97
    %v117 = vunpack.c.l.b16 %v79
    %v118 = vunpack.c.l.b16 %v80
    %v119 = vunpack.c.l.b16 %v81
    %v120 = vunpack.c.l.b16 %v82
    %v121 = vunpack.c.l.b16 %v83
    %v122 = vunpack.c.l.b16 %v84
    %v123 = vunpack.c.l.b16 %v85
    %v124 = vunpack.c.l.b16 %v86
    %v125 = vunpack.c.l.b16 %v87
    %v126 = vunpack.c.l.b16 %v88
    %v127 = vunpack.c.l.b16 %v89
    %v128 = vunpack.c.l.b16 %v90
    %v129 = vunpack.c.l.b16 %v91
    %v130 = vunpack.c.l.b16 %v92
    %v131 = vunpack.c.l.b16 %v93
    %v132 = vunpack.c.l.b16 %v94
    %v133 = vpack.c.b16 %v118, %v117
    %v134 = vpack.c.b16 %v120, %v119
    %v135 = vpack.c.b16 %v122, %v121
    %v136 = vpack.c.b16 %v124, %v123
    %v137 = vpack.c.b16 %v126, %v125
    %v138 = vpack.c.b16 %v128, %v127
    %v139 = vpack.c.b16 %v130, %v129
    %v140 = vpack.c.b16 %v132, %v131
    %149 = vmatprep.subr.bf16.mxu0 0
    %150 = vmatpush1.bf16.msra.mxu0 %v133
    %151 = vmatprep.subr.bf16.mxu0 0
    %152 = vmatpush1.bf16.msra.mxu0 %v134
    %153 = vmatprep.subr.bf16.mxu0 0
    %154 = vmatpush1.bf16.msra.mxu0 %v135
    %155 = vmatprep.subr.bf16.mxu0 0
    %156 = vmatpush1.bf16.msra.mxu0 %v136
    %157 = vmatprep.subr.bf16.mxu0 0
    %158 = vmatpush1.bf16.msra.mxu0 %v137
    %159 = vmatprep.subr.bf16.mxu0 0
    %160 = vmatpush1.bf16.msra.mxu0 %v138
    %161 = vmatprep.subr.bf16.mxu0 0
    %162 = vmatpush1.bf16.msra.mxu0 %v139
    %163 = vmatprep.subr.bf16.mxu0 0
    %164 = vmatpush1.bf16.msra.mxu0 %v140
    %165 = vmatprep.subr.bf16.mxu0 0
    %166 = vmatpush1.bf16.msra.mxu0 0
    %167 = vmatprep.subr.bf16.mxu0 0
    %168 = vmatpush1.bf16.msra.mxu0 0
    %169 = vmatprep.subr.bf16.mxu0 0
    %170 = vmatpush1.bf16.msra.mxu0 0
    %171 = vmatprep.subr.bf16.mxu0 0
    %172 = vmatpush1.bf16.msra.mxu0 0
    %173 = vmatprep.subr.bf16.mxu0 0
    %174 = vmatpush1.bf16.msra.mxu0 0
    %175 = vmatprep.subr.bf16.mxu0 0
    %176 = vmatpush1.bf16.msra.mxu0 0
    %177 = vmatprep.subr.bf16.mxu0 0
    %178 = vmatpush1.bf16.msra.mxu0 0
    %179 = vmatprep.subr.bf16.mxu0 0
    %180 = vmatpush1.bf16.msra.mxu0 0
    %181 = vmatprep.mubr.bf16.mxu0 0
    %182 = vmatmul.mubr.bf16.gmra.mrb[0].mxu0 %v99
    %v183 = vpop.f32.mrb[0].mxu0
    %v184 = vadd.f32 0.0, %v183
    %v185 = vpop.f32.mrb[0].mxu0
    %v186 = vpop.f32.mrb[0].mxu0
    %v187 = vadd.f32 0.0, %v186
    %v188 = vpop.f32.mrb[0].mxu0
    %189 = vdwg.mxu0
    %v190 = vadd.f32 %v75, %v184
    %v191 = vadd.f32 %v76, %v187
    %192 = vst [vmem:[#allocation2] sm:$0xff] %v190
    %193 = vst [vmem:[#allocation2 + $0x8] sm:$0xff] %v191
    // Predicated region
    $region46: #{tpu_custom_call.1} parent=1 // pred_check
      %p194 = pneg %p69
    $region47: #{tpu_custom_call.1} parent=1 // pred_check_branch
      %196 = sbr.rel (%p194) target = $region49
    $region48: #{tpu_custom_call.1} parent=1 // pred_region
      %v197 = vld [vmem:[#allocation2] sm:$0xff]
      %v198 = vld [vmem:[#allocation2 + $0x8] sm:$0xff]
      %v199 = vld [vmem:[%s2] sm:$0x1]
      %v201 = vlaneseq
      %v202 = vshrl.u32 %v201, 7
      %v203 = vsub.s32 0, %v202
      %v204 = vrot.slane %v199, %v203
      %v206 = vadd.f32 %v197, %v204
      %v207 = vadd.f32 %v198, %v204
      %v208 = vmul.f32 %v206, 0.5
      %v209 = vmul.f32 %v207, 0.5
      %v210 = vmul.f32 %v206, 0.044715
      %v211 = vmul.f32 %v207, 0.044715
      %v212 = vmul.f32 %v210, %v206
      %v213 = vmul.f32 %v211, %v207
      %v214 = vmul.f32 %v212, %v206
      %v215 = vmul.f32 %v213, %v207
      %v216 = vadd.f32 %v206, %v214
      %v217 = vadd.f32 %v207, %v215
      %v218 = vmul.f32 %v216, 0.7978846
      %v219 = vmul.f32 %v217, 0.7978846
      %v220 = vtanh.pop %v218
      %v221 = vtanh.pop %v219
      %v222 = vadd.f32 %v220, 1.0
      %v223 = vadd.f32 %v221, 1.0
      %v224 = vmul.f32 %v208, %v222
      %v225 = vmul.f32 %v209, %v223
      %v226 = vpack.c.bf16 %v225, %v224
      %v227 = vld [vmem:[#allocation8] sm:$0xf]
      %v228 = vld [vmem:[#allocation8 + $0x4] sm:$0xf]
      %v229 = vld [vmem:[#allocation8 + $0x8] sm:$0xf]
      %v230 = vld [vmem:[#allocation8 + $0xc] sm:$0xf]
      %v231 = vld [vmem:[#allocation8 + $0x10] sm:$0xf]
      %v232 = vld [vmem:[#allocation8 + $0x14] sm:$0xf]
      %v233 = vld [vmem:[#allocation8 + $0x18] sm:$0xf]
      %v234 = vld [vmem:[#allocation8 + $0x1c] sm:$0xf]
      %v235 = vld [vmem:[#allocation8 + $0x20] sm:$0xf]
      %v236 = vld [vmem:[#allocation8 + $0x24] sm:$0xf]
      %v237 = vld [vmem:[#allocation8 + $0x28] sm:$0xf]
      %v238 = vld [vmem:[#allocation8 + $0x2c] sm:$0xf]
      %v239 = vld [vmem:[#allocation8 + $0x30] sm:$0xf]
      %v240 = vld [vmem:[#allocation8 + $0x34] sm:$0xf]
      %v241 = vld [vmem:[#allocation8 + $0x38] sm:$0xf]
      %v242 = vld [vmem:[#allocation8 + $0x3c] sm:$0xf]
      %v243 = vld [vmem:[%s4] sm:$0x1]
      %v245 = vlaneseq
      %v246 = vshrl.u32 %v245, 7
      %v247 = vsub.s32 0, %v246
      %v248 = vrot.slane %v243, %v247
      %v266 = vunpack.c.l.b16 %v227
      %v267 = vunpack.c.l.b16 %v228
      %v268 = vunpack.c.l.b16 %v229
      %v269 = vunpack.c.l.b16 %v230
      %v270 = vunpack.c.l.b16 %v231
      %v271 = vunpack.c.l.b16 %v232
      %v272 = vunpack.c.l.b16 %v233
      %v273 = vunpack.c.l.b16 %v234
      %v274 = vunpack.c.l.b16 %v235
      %v275 = vunpack.c.l.b16 %v236
      %v276 = vunpack.c.l.b16 %v237
      %v277 = vunpack.c.l.b16 %v238
      %v278 = vunpack.c.l.b16 %v239
      %v279 = vunpack.c.l.b16 %v240
      %v280 = vunpack.c.l.b16 %v241
      %v281 = vunpack.c.l.b16 %v242
      %v282 = vpack.c.b16 %v267, %v266
      %v283 = vpack.c.b16 %v269, %v268
      %v284 = vpack.c.b16 %v271, %v270
      %v285 = vpack.c.b16 %v273, %v272
      %v286 = vpack.c.b16 %v275, %v274
      %v287 = vpack.c.b16 %v277, %v276
      %v288 = vpack.c.b16 %v279, %v278
      %v289 = vpack.c.b16 %v281, %v280
      %298 = vmatprep.subr.bf16.mxu0 0
      %299 = vmatpush1.bf16.msra.mxu0 %v282
      %300 = vmatprep.subr.bf16.mxu0 0
      %301 = vmatpush1.bf16.msra.mxu0 %v283
      %302 = vmatprep.subr.bf16.mxu0 0
      %303 = vmatpush1.bf16.msra.mxu0 %v284
      %304 = vmatprep.subr.bf16.mxu0 0
      %305 = vmatpush1.bf16.msra.mxu0 %v285
      %306 = vmatprep.subr.bf16.mxu0 0
      %307 = vmatpush1.bf16.msra.mxu0 %v286
      %308 = vmatprep.subr.bf16.mxu0 0
      %309 = vmatpush1.bf16.msra.mxu0 %v287
      %310 = vmatprep.subr.bf16.mxu0 0
      %311 = vmatpush1.bf16.msra.mxu0 %v288
      %312 = vmatprep.subr.bf16.mxu0 0
      %313 = vmatpush1.bf16.msra.mxu0 %v289
      %314 = vmatprep.subr.bf16.mxu0 0
      %315 = vmatpush1.bf16.msra.mxu0 0
      %316 = vmatprep.subr.bf16.mxu0 0
      %317 = vmatpush1.bf16.msra.mxu0 0
      %318 = vmatprep.subr.bf16.mxu0 0
      %319 = vmatpush1.bf16.msra.mxu0 0
      %320 = vmatprep.subr.bf16.mxu0 0
      %321 = vmatpush1.bf16.msra.mxu0 0
      %322 = vmatprep.subr.bf16.mxu0 0
      %323 = vmatpush1.bf16.msra.mxu0 0
      %324 = vmatprep.subr.bf16.mxu0 0
      %325 = vmatpush1.bf16.msra.mxu0 0
      %326 = vmatprep.subr.bf16.mxu0 0
      %327 = vmatpush1.bf16.msra.mxu0 0
      %328 = vmatprep.subr.bf16.mxu0 0
      %329 = vmatpush1.bf16.msra.mxu0 0
      %330 = vmatprep.mubr.bf16.mxu0 0
      %331 = vmatmul.mubr.bf16.gmra.mrb[0].mxu0 %v226
      %v332 = vpop.f32.mrb[0].mxu0
      %v333 = vadd.f32 %v248, %v332
      %v334 = vpop.f32.mrb[0].mxu0
      %v335 = vpop.f32.mrb[0].mxu0
      %v336 = vadd.f32 %v248, %v335
      %v337 = vpop.f32.mrb[0].mxu0
      %338 = vdwg.mxu0
      %v339 = vlaneseq
      %v340 = vand.u32 %v339, 127
      %vm341 = vcmp.lt.s32.totalorder %v340, 16
      %v342 = vsel %vm341, %v333, 0.0
      %v343 = vsel %vm341, %v336, 0.0
      %344 = vadd.xlane.f32.xlu0 %v342
      %v345 = vpop.xlane.xlu0 %344
      %346 = vadd.xlane.f32.xlu0 %v343
      %v347 = vpop.xlane.xlu0 %346
      %v348 = vmul.f32 %v345, 0.0625
      %v349 = vmul.f32 %v347, 0.0625
      %v350 = vsub.f32 %v342, %v348
      %v351 = vsub.f32 %v343, %v349
      %v352 = vsel %vm341, %v350, 0.0
      %v353 = vsel %vm341, %v351, 0.0
      %v354 = vmul.f32 %v352, %v352
      %v355 = vmul.f32 %v353, %v353
      %356 = vadd.xlane.f32.xlu0 %v354
      %v357 = vpop.xlane.xlu0 %356
      %358 = vadd.xlane.f32.xlu0 %v355
      %v359 = vpop.xlane.xlu0 %358
      %v360 = vmul.f32 %v357, 0.0625
      %v361 = vmul.f32 %v359, 0.0625
      %v362 = vadd.f32 %v360, 1e-05
      %v363 = vadd.f32 %v361, 1e-05
      %v364 = vrsqrt.pop %v362
      %v365 = vrsqrt.pop %v363
      %v366 = vmul.f32 %v352, %v364
      %v367 = vmul.f32 %v353, %v365
      %v368 = vld [vmem:[%s5] sm:$0x1]
      %v370 = vlaneseq
      %v371 = vshrl.u32 %v370, 7
      %v372 = vsub.s32 0, %v371
      %v373 = vrot.slane %v368, %v372
      %v375 = vmul.f32 %v366, %v373
      %v376 = vmul.f32 %v367, %v373
      %v377 = vld [vmem:[%s6] sm:$0x1]
      %v379 = vlaneseq
      %v380 = vshrl.u32 %v379, 7
      %v381 = vsub.s32 0, %v380
      %v382 = vrot.slane %v377, %v381
      %v384 = vadd.f32 %v375, %v382
      %v385 = vadd.f32 %v376, %v382
      %386 = vst [vmem:[#allocation9] sm:$0xff] %v384
      %387 = vst [vmem:[#allocation9 + $0x8] sm:$0xff] %v385
    $region49: #{tpu_custom_call.1} parent=1 // pred_fallthru
      _
    // Predicated region
    $region50: #{tpu_custom_call.1} parent=1 // pred_check
      _
    $region51: #{tpu_custom_call.1} parent=1 // pred_check_branch
      %389 = sbr.rel (0) target = $region53
    $region52: #{tpu_custom_call.1} parent=1 // pred_region
      %s391 = ssub.s32 256, 256
      %392 = vsyncadd [#allocation5], %s391
      %s393 = sshll.u32 [#allocation9], 4
      %s394 = int_to_ptr.vmem [resolvable:$true] %s393
      %399 = dma.vmem_to_hbm [thread:$0]  %s394, 256, %s7, [#allocation5], 128, 128, 8
    $region53: #{tpu_custom_call.1} parent=1 // pred_fallthru
      _
    // Predicated region
    $region54: #{tpu_custom_call.1} parent=1 // pred_check
      _
    $region55: #{tpu_custom_call.1} parent=1 // pred_check_branch
      %401 = sbr.rel (0) target = $region57
    $region56: #{tpu_custom_call.1} parent=1 // pred_region
      %402 = dma.done [#allocation5], 256
    $region57: #{tpu_custom_call.1} parent=1 // pred_fallthru
      _
    %403 = vsyncpa [#allocation4], 1
    %404 = vsyncpa [#allocation7], 1
    %405 = vsyncpa [#allocation5], 1

</llo_original>
